<compile_context>
chip_gen: v7x
topology: tpu7x:2x2x1
jax: 0.10.0
libtpu: 0.0.40
codegen_flags: <defaults>
</compile_context>

<pallas_src>
import functools

import jax
import jax.numpy as jnp
from jax import lax
from jax.experimental import pallas as pl
from jax.experimental.pallas import tpu as pltpu

_SUBLANES = 8
_LANES = 128
_MAX_TB = 8192                      # review: old 1024 cap removed
_CHUNK_ROWS = 512                   # target rows per in-kernel f32 sub-chunk
_TEMP_BYTES_BUDGET = 8 * 1024 * 1024   # cap on live f32 chunk temporaries
_F32_TEMPS_PER_CHUNK = 5            # f1/f2 upcasts + ~3 (fused) products, conservative


def _round_up(x, m):
    return ((x + m - 1) // m) * m


def _vmem_capacity_bytes():
    """Generation-aware VMEM capacity; conservative fallback = v7x per-TC."""
    try:
        cap = int(getattr(pltpu.get_tpu_info(), "vmem_capacity_bytes", 0))
        if cap > 0:
            return cap
    except Exception:
        pass
    return 64 * 1024 * 1024


def _cos_rows(f1, f2):
    """Per-row cosine similarity of two (rows, D) chunks (f32 math)."""
    f1 = f1.astype(jnp.float32)
    f2 = f2.astype(jnp.float32)
    dot = jnp.sum(f1 * f2, axis=1, keepdims=True)
    ss1 = jnp.sum(f1 * f1, axis=1, keepdims=True)
    ss2 = jnp.sum(f2 * f2, axis=1, keepdims=True)
    eps2 = jnp.float32(1e-16)                       # eps ** 2, eps = 1e-8
    inv1 = lax.rsqrt(jnp.maximum(ss1, eps2))        # EUP slot
    inv2 = lax.rsqrt(jnp.maximum(ss2, eps2))
    return dot * inv1 * inv2                        # (rows, 1)


def _cosine_kernel(f1_ref, f2_ref, cos_ref, *, chunk, n_chunks):
    if n_chunks == 1:
        cos_ref[...] = _cos_rows(f1_ref[...], f2_ref[...])
    else:
        def body(c, carry):
            r0 = pl.multiple_of(c * chunk, chunk)
            cos_ref[pl.ds(r0, chunk), :] = _cos_rows(
                f1_ref[pl.ds(r0, chunk), :], f2_ref[pl.ds(r0, chunk), :])
            return carry
        # Bounds the live f32 temporaries to one chunk while keeping the DMA
        # tile (tb) large; unroll=True keeps the short loop visible to LLO.
        lax.fori_loop(0, n_chunks, body, 0, unroll=True)


def _rowwise_cosine(feat1, feat2, *, block_rows=None, chunk_rows=None):
    """Pallas: per-row cosine similarity of (B, D) feature arrays -> (B,) f32."""
    B, D = feat1.shape
    itemsize = jnp.dtype(feat1.dtype).itemsize

    cap = _vmem_capacity_bytes()
    budget = max(16 << 20, min(int(0.55 * cap), 40 << 20))     # working-set target
    vmem_limit = max(32 << 20, min(int(0.72 * cap), 48 << 20))  # scoped VMEM limit

    # Row sub-chunk: bound the f32 intermediates to ~_TEMP_BYTES_BUDGET.
    chunk = _TEMP_BYTES_BUDGET // (_F32_TEMPS_PER_CHUNK * 4 * D)
    chunk = max(_SUBLANES, min(_CHUNK_ROWS, (chunk // _SUBLANES) * _SUBLANES))
    if chunk_rows is not None:
        chunk = max(_SUBLANES, min(chunk, (chunk_rows // _SUBLANES) * _SUBLANES))

    # Per-row VMEM: 2 inputs x 2 buffers x D x itemsize (features)
    #             + 2 buffers x 128 lanes x 4 B (lane-padded (tb,1) f32 output).
    row_bytes = 4 * D * itemsize + 2 * _LANES * 4
    avail = budget - _F32_TEMPS_PER_CHUNK * 4 * chunk * D - (2 << 20)
    tb = max(_SUBLANES, (max(avail, 0) // row_bytes // _SUBLANES) * _SUBLANES)
    tb = min(tb, _MAX_TB)
    if block_rows is not None:
        tb = min(tb, max(_SUBLANES, (block_rows // _SUBLANES) * _SUBLANES))
    tb = min(tb, _round_up(B, _SUBLANES))
    if tb <= chunk:
        chunk = tb
    else:
        tb = (tb // chunk) * chunk
    n_chunks = tb // chunk

    grid = (pl.cdiv(B, tb),)
    kernel = functools.partial(_cosine_kernel, chunk=chunk, n_chunks=n_chunks)

    # NOTE: per review, pl.Buffered(3) on the feature specs is an option if a
    # trace ever shows exposed DMA at step boundaries; depth 2 keeps VMEM low.
    cos = pl.pallas_call(
        kernel,
        out_shape=jax.ShapeDtypeStruct((B, 1), jnp.float32),
        grid=grid,
        in_specs=[pl.BlockSpec((tb, D), lambda i: (i, 0)),
                  pl.BlockSpec((tb, D), lambda i: (i, 0))],
        out_specs=pl.BlockSpec((tb, 1), lambda i: (i, 0)),
        compiler_params=pltpu.CompilerParams(
            dimension_semantics=("parallel",),
            vmem_limit_bytes=int(vmem_limit)),
    )(feat1, feat2)
    return cos[:, 0]


def npd_loss(pred, label, feat1, feat2, alpha=1.0, *,
             block_rows=None, chunk_rows=None):
    """Pallas implementation of NPDLoss.forward.

    pred, label : (B,) probabilities / targets (any float dtype)
    feat1, feat2: (B, D) feature vectors (any float dtype, e.g. bf16 or f32)
    Returns a float32 scalar.
    """
    B = pred.shape[0]
    cos = _rowwise_cosine(feat1, feat2,
                          block_rows=block_rows, chunk_rows=chunk_rows)  # (B,)

    # BCE and the label/contrastive combine are O(B) elementwise + one reduce;
    # negligible HBM traffic next to the (B, D) feature streams, so doing them
    # here (instead of lane-sparse (tb,1) blocks in-kernel) is a pure win.
    p = pred.astype(jnp.float32).reshape(-1)
    y = label.astype(jnp.float32).reshape(-1)
    log_p = jnp.maximum(jnp.log(p), -100.0)          # F.binary_cross_entropy clamp
    log_1mp = jnp.maximum(jnp.log(1.0 - p), -100.0)
    bce = -jnp.mean(y * log_p + (1.0 - y) * log_1mp)

    cos_dist = 1.0 - cos
    contrastive = jnp.mean(y * cos_dist + (1.0 - y) * (1.0 - cos_dist))
    return bce + jnp.float32(alpha) * contrastive


def _npd_loss_ref(pred, label, feat1, feat2, alpha=1.0):
    # Pure-JAX reference mirroring the PyTorch module.
    p = pred.astype(jnp.float32)
    y = label.astype(jnp.float32)
    f1 = feat1.astype(jnp.float32)
    f2 = feat2.astype(jnp.float32)
    log_p = jnp.maximum(jnp.log(p), -100.0)
    log_1mp = jnp.maximum(jnp.log(1.0 - p), -100.0)
    bce = -jnp.mean(y * log_p + (1.0 - y) * log_1mp)
    dot = jnp.sum(f1 * f2, axis=1)
    n1 = jnp.sqrt(jnp.sum(f1 * f1, axis=1))
    n2 = jnp.sqrt(jnp.sum(f2 * f2, axis=1))
    cos = dot / (jnp.maximum(n1, 1e-8) * jnp.maximum(n2, 1e-8))
    cos_dist = 1.0 - cos
    contrastive = jnp.mean(y * cos_dist + (1.0 - y) * (1.0 - cos_dist))
    return bce + alpha * contrastive


if __name__ == "__main__":
    keys = jax.random.split(jax.random.PRNGKey(0), 8)

    # Case 1: tiny f32 case (single tile, single chunk, exact fit).
    B, D = 8, 32
    pred = jax.nn.sigmoid(jax.random.normal(keys[0], (B,), dtype=jnp.float32))
    label = jax.random.bernoulli(keys[1], 0.5, (B,)).astype(jnp.float32)
    feat1 = jax.random.normal(keys[2], (B, D), dtype=jnp.float32)
    feat2 = jax.random.normal(keys[3], (B, D), dtype=jnp.float32)
    loss = jax.block_until_ready(npd_loss(pred, label, feat1, feat2, alpha=1.0))
    ref = _npd_loss_ref(pred, label, feat1, feat2, alpha=1.0)
    assert jnp.allclose(loss, ref, rtol=1e-5, atol=1e-5), (loss, ref)

    # Case 2: bf16 features, ragged batch, multi-tile grid + multi-chunk loop.
    B2, D2 = 300, 256
    pred_b = jax.nn.sigmoid(jax.random.normal(keys[4], (B2,), dtype=jnp.float32))
    label_b = jax.random.bernoulli(keys[5], 0.5, (B2,)).astype(jnp.float32)
    feat1_b = jax.random.normal(keys[6], (B2, D2), dtype=jnp.bfloat16)
    feat2_b = jax.random.normal(keys[7], (B2, D2), dtype=jnp.bfloat16)
    loss2 = jax.block_until_ready(
        npd_loss(pred_b, label_b, feat1_b, feat2_b, alpha=0.5,
                 block_rows=128, chunk_rows=64))
    ref2 = _npd_loss_ref(pred_b, label_b, feat1_b, feat2_b, alpha=0.5)
    assert jnp.allclose(loss2, ref2, rtol=1e-4, atol=1e-4), (loss2, ref2)

    # Case 3: same data, default (auto) tiling path — single boundary block.
    loss3 = jax.block_until_ready(
        npd_loss(pred_b, label_b, feat1_b, feat2_b, alpha=2.0))
    ref3 = _npd_loss_ref(pred_b, label_b, feat1_b, feat2_b, alpha=2.0)
    assert jnp.allclose(loss3, ref3, rtol=1e-4, atol=1e-4), (loss3, ref3)

    print("KERNEL_OK")
</pallas_src>

<mosaic_0001>
module attributes {stable_mosaic.version = 11 : i64} {
  func.func @_cosine_kernel(%arg0: i32, %arg1: memref<8x32xf32, #tpu.memory_space<vmem>>, %arg2: memref<8x32xf32, #tpu.memory_space<vmem>>, %arg3: memref<8x1xf32, #tpu.memory_space<vmem>>) attributes {dimension_semantics = [#tpu.dimension_semantics<parallel>], iteration_bounds = array<i64: 1>, scalar_prefetch = 0 : i64, scratch_operands = 0 : i64, tpu.core_type = #tpu.core_type<tc>, window_params = [{transform_indices = @transform_0, window_bounds = array<i64: 8, 32>}, {transform_indices = @transform_1, window_bounds = array<i64: 8, 32>}, {transform_indices = @transform_2, window_bounds = array<i64: 8, 1>}]} {
    %c0 = arith.constant 0 : index
    %c0_0 = arith.constant 0 : index
    %0 = vector.load %arg1[%c0, %c0_0] : memref<8x32xf32, #tpu.memory_space<vmem>>, vector<8x32xf32>
    %c0_1 = arith.constant 0 : index
    %c0_2 = arith.constant 0 : index
    %1 = vector.load %arg2[%c0_1, %c0_2] : memref<8x32xf32, #tpu.memory_space<vmem>>, vector<8x32xf32>
    %2 = arith.mulf %0, %1 : vector<8x32xf32>
    %cst = arith.constant dense<0.000000e+00> : vector<8xf32>
    %3 = vector.multi_reduction <add>, %2, %cst [1] : vector<8x32xf32> to vector<8xf32>
    %4 = vector.shape_cast %3 : vector<8xf32> to vector<8x1xf32>
    %5 = arith.mulf %0, %0 : vector<8x32xf32>
    %cst_3 = arith.constant dense<0.000000e+00> : vector<8xf32>
    %6 = vector.multi_reduction <add>, %5, %cst_3 [1] : vector<8x32xf32> to vector<8xf32>
    %7 = vector.shape_cast %6 : vector<8xf32> to vector<8x1xf32>
    %8 = arith.mulf %1, %1 : vector<8x32xf32>
    %cst_4 = arith.constant dense<0.000000e+00> : vector<8xf32>
    %9 = vector.multi_reduction <add>, %8, %cst_4 [1] : vector<8x32xf32> to vector<8xf32>
    %10 = vector.shape_cast %9 : vector<8xf32> to vector<8x1xf32>
    %cst_5 = arith.constant 1.000000e-16 : f32
    %11 = vector.broadcast %cst_5 : f32 to vector<8x1xf32>
    %12 = arith.maximumf %7, %11 : vector<8x1xf32>
    %13 = math.rsqrt %12 : vector<8x1xf32>
    %cst_6 = arith.constant 1.000000e-16 : f32
    %14 = vector.broadcast %cst_6 : f32 to vector<8x1xf32>
    %15 = arith.maximumf %10, %14 : vector<8x1xf32>
    %16 = math.rsqrt %15 : vector<8x1xf32>
    %17 = arith.mulf %4, %13 : vector<8x1xf32>
    %18 = arith.mulf %17, %16 : vector<8x1xf32>
    %c0_7 = arith.constant 0 : index
    %c0_8 = arith.constant 0 : index
    %19 = vector.load %arg3[%c0_7, %c0_8] : memref<8x1xf32, #tpu.memory_space<vmem>>, vector<8x1xf32>
    tpu.vector_store %arg3[%c0_7, %c0_8], %18 {strides = array<i32>} : memref<8x1xf32, #tpu.memory_space<vmem>>, vector<8x1xf32>,
    return
  }
  func.func @transform_0(%arg0: i32) -> (i32, i32) {
    %c0_i32 = arith.constant 0 : i32
    %c0_i32_0 = arith.constant 0 : i32
    return %arg0, %c0_i32 : i32, i32
  }
  func.func @transform_1(%arg0: i32) -> (i32, i32) {
    %c0_i32 = arith.constant 0 : i32
    %c0_i32_0 = arith.constant 0 : i32
    return %arg0, %c0_i32 : i32, i32
  }
  func.func @transform_2(%arg0: i32) -> (i32, i32) {
    %c0_i32 = arith.constant 0 : i32
    %c0_i32_0 = arith.constant 0 : i32
    return %arg0, %c0_i32 : i32, i32
  }
}

</mosaic_0001>

<llo_original>
// kernel: tpu_custom_call.1
$region0: #{tpu_custom_call.1}
  #allocation0 [shape = 'u32[]', space=smem, size = 0x4, offset = 0x4, fixed_abs, tag = 'smem constant byte address 0x4 - core index']
  #allocation1 [shape = 'u32[144,128]{1,0:T(1,128)}', space=vmem, size = 0x12000, scoped, tag = 'internal scratch']
  %s0 = inlined_call_operand.hbm [shape: f32[8,32], index: 0, kind: input, shape index: {}]
  %s1 = inlined_call_operand.hbm [shape: f32[8,32], index: 1, kind: input, shape index: {}]
  %s2 = inlined_call_operand.vmem [shape: f32[8,1], index: 2, kind: output, shape index: {}]
  %s3 = sld [smem:[#allocation0]]
  $region26: #{tpu_custom_call.1} parent=0
    _
  %s5 = ssub.s32 1, %s3
  %s6 = scalar_select 0, %s5, %s3
  $region1: #{tpu_custom_call.1} parent=0
    #allocation2 [shape = 'u8[4096]{0}', space=vmem, size = 0x1000, scoped, tag = 'input window, operand 0, single buffered']
    #allocation3 [shape = 's32[1]{0}', space=sflag, size = 0x4, scoped, tag = 'scoped memory for tpu_custom_call.1']
    #allocation4 [shape = 'u8[4096]{0}', space=vmem, size = 0x1000, scoped, tag = 'input window, operand 1, single buffered']
    #allocation5 [shape = 's32[1]{0}', space=sflag, size = 0x4, scoped, tag = 'scoped memory for tpu_custom_call.1']
    %7 = vsyncpa [#allocation3], 0
    %8 = vsyncpa [#allocation5], 0
    // Predicated region
    $region2: #{tpu_custom_call.1} parent=1 // pred_check
      _
    $region3: #{tpu_custom_call.1} parent=1 // pred_check_branch
      %10 = sbr.rel (0) target = $region5
    $region4: #{tpu_custom_call.1} parent=1 // pred_region
      %s12 = ssub.s32 128, 128
      %13 = vsyncadd [#allocation3], %s12
      %s15 = sshll.u32 [#allocation2], 4
      %s16 = int_to_ptr.vmem [resolvable:$true] %s15
      %18 = dma.hbm_to_vmem [thread:$0]  %s0, 128, %s16, [#allocation3]
    $region5: #{tpu_custom_call.1} parent=1 // pred_fallthru
      _
    // Predicated region
    $region6: #{tpu_custom_call.1} parent=1 // pred_check
      _
    $region7: #{tpu_custom_call.1} parent=1 // pred_check_branch
      %20 = sbr.rel (0) target = $region9
    $region8: #{tpu_custom_call.1} parent=1 // pred_region
      %s22 = ssub.s32 128, 128
      %23 = vsyncadd [#allocation5], %s22
      %s25 = sshll.u32 [#allocation4], 4
      %s26 = int_to_ptr.vmem [resolvable:$true] %s25
      %28 = dma.hbm_to_vmem [thread:$0]  %s1, 128, %s26, [#allocation5]
    $region9: #{tpu_custom_call.1} parent=1 // pred_fallthru
      _
    // Predicated region
    $region10: #{tpu_custom_call.1} parent=1 // pred_check
      _
    $region11: #{tpu_custom_call.1} parent=1 // pred_check_branch
      %30 = sbr.rel (0) target = $region13
    $region12: #{tpu_custom_call.1} parent=1 // pred_region
      %31 = dma.done [#allocation3], 128
    $region13: #{tpu_custom_call.1} parent=1 // pred_fallthru
      _
    // Predicated region
    $region14: #{tpu_custom_call.1} parent=1 // pred_check
      _
    $region15: #{tpu_custom_call.1} parent=1 // pred_check_branch
      %33 = sbr.rel (0) target = $region17
    $region16: #{tpu_custom_call.1} parent=1 // pred_region
      %34 = dma.done [#allocation5], 128
    $region17: #{tpu_custom_call.1} parent=1 // pred_fallthru
      _
    %v35 = vld [vmem:[#allocation2] sm:$0xff]
    %v36 = vld [vmem:[#allocation4] sm:$0xff]
    %v37 = vmul.f32 %v35, %v36
    %vm38 = vcmask 261120
    %v39 = vsel %vm38, %v37, 0.0
    %40 = vadd.xlane.f32.xlu0 %v39
    %v41 = vpop.xlane.xlu0 %40
    %v42 = vmul.f32 %v35, %v35
    %v43 = vsel %vm38, %v42, 0.0
    %44 = vadd.xlane.f32.xlu0 %v43
    %v45 = vpop.xlane.xlu0 %44
    %v46 = vmul.f32 %v36, %v36
    %v47 = vsel %vm38, %v46, 0.0
    %48 = vadd.xlane.f32.xlu0 %v47
    %v49 = vpop.xlane.xlu0 %48
    %v50 = vmax.f32 %v45, 1e-16
    %v51 = vrsqrt.pop %v50
    %v52 = vmax.f32 %v49, 1e-16
    %v53 = vrsqrt.pop %v52
    %v54 = vmul.f32 %v41, %v51
    %v55 = vmul.f32 %v54, %v53
    %vm56 = vcmask 7168
    %57 = vst.msk [vmem:[%s2] sm:$0xff] %vm56, %v55
    // Predicated region
    $region18: #{tpu_custom_call.1} parent=1 // pred_check
      _
    $region19: #{tpu_custom_call.1} parent=1 // pred_check_branch
      %59 = sbr.rel (0) target = $region21
    $region20: #{tpu_custom_call.1} parent=1 // pred_region
      _
    $region21: #{tpu_custom_call.1} parent=1 // pred_fallthru
      _
    // Predicated region
    $region22: #{tpu_custom_call.1} parent=1 // pred_check
      _
    $region23: #{tpu_custom_call.1} parent=1 // pred_check_branch
      %61 = sbr.rel (0) target = $region25
    $region24: #{tpu_custom_call.1} parent=1 // pred_region
      _
    $region25: #{tpu_custom_call.1} parent=1 // pred_fallthru
      _
    %62 = vsyncpa [#allocation3], 1
    %63 = vsyncpa [#allocation5], 1

</llo_original>
